<compile_context>
chip_gen: v6e
topology: v6e:2x2x1
jax: 0.10.0
libtpu: 0.0.40
codegen_flags: <defaults>
</compile_context>

<pallas_src>
import functools

import jax
import jax.numpy as jnp
import numpy as np
from jax.experimental import pallas as pl
from jax.experimental.pallas import tpu as pltpu


def _round_up(x, m):
    return ((x + m - 1) // m) * m


def _bce_kernel(x_ref, y_ref, o_ref, *, total, rows, lane, tile_r,
                nblocks, steps, pos_weight):
    c = pl.program_id(0)            # shard (TensorCore) index
    i = pl.program_id(1)            # step within shard
    blk = c * steps + i             # global row-block index (may be >= nblocks)

    # The output block (this shard's (8, lane) partial sum) has a constant
    # index along the step axis -> it stays resident in VMEM and acts as the
    # accumulator.  Initialize once per shard.
    @pl.when(i == 0)
    def _init():
        o_ref[...] = jnp.zeros_like(o_ref)

    @pl.when(blk < nblocks)         # skip the duplicated (clamped) tail step
    def _compute():
        x = x_ref[...].astype(jnp.float32)       # (tile_r, lane) logits
        y = y_ref[...].astype(jnp.float32)       # (tile_r, lane) targets

        # Numerically stable softplus(x) = max(x, 0) + log1p(exp(-|x|))
        sp_pos = jnp.maximum(x, 0.0) + jnp.log1p(jnp.exp(-jnp.abs(x)))
        if pos_weight == 1.0:
            # canonical stable BCE-with-logits: max(x,0) - x*y + log1p(exp(-|x|))
            loss = sp_pos - x * y
        else:
            # pos_weight * y * softplus(-x) + (1 - y) * softplus(x)
            loss = pos_weight * y * (sp_pos - x) + (1.0 - y) * sp_pos

        def _accumulate(l):
            # Fold (tile_r, lane) -> (8, lane) with pure VPU vreg adds; the
            # single tiny cross-lane/sublane reduction happens in the wrapper.
            o_ref[...] += jnp.sum(l.reshape(tile_r // 8, 8, lane), axis=0)

        @pl.when(blk < nblocks - 1)
        def _interior():
            # Interior tiles: no mask arithmetic at all.
            _accumulate(loss)

        @pl.when(blk == nblocks - 1)
        def _boundary():
            # Only the boundary block can contain padded / out-of-range data.
            # Row-based comparison (no flat-index int32 overflow).
            r = jax.lax.broadcasted_iota(jnp.int32, loss.shape, 0) + blk * tile_r
            col = jax.lax.broadcasted_iota(jnp.int32, loss.shape, 1)
            tail = total - (rows - 1) * lane      # valid cols of the last row
            valid = (r < rows - 1) | ((r == rows - 1) & (col < tail))
            _accumulate(jnp.where(valid, loss, 0.0))


def bce_with_logits_loss(prediction, targets, *, pos_weight=1.0,
                         tile_rows=1024, lane=512, num_shards=2):
    """Semantics of nn.BCEWithLogitsLoss(reduction='mean', pos_weight=scalar)."""
    assert prediction.shape == targets.shape
    assert lane % 128 == 0
    total = int(np.prod(prediction.shape))
    assert total > 0

    # Free, layout-preserving flatten (no transpose).  Inputs are streamed in
    # their original dtype; the f32 cast happens in-register in the kernel.
    x = prediction.reshape(-1)
    y = targets.reshape(-1)

    rows = -(-total // lane)              # logical rows (last may be ragged)
    # Pad only to one sublane group (8 * lane elements); aligned inputs pay
    # nothing, ragged last blocks are handled by the in-kernel mask.
    align = 8 * lane
    pad = (-total) % align
    if pad:
        x = jnp.pad(x, (0, pad))
        y = jnp.pad(y, (0, pad))
    rows_arr = (total + pad) // lane      # multiple of 8
    x = x.reshape(rows_arr, lane)
    y = y.reshape(rows_arr, lane)

    tile_r = min(_round_up(tile_rows, 8), rows_arr)   # both multiples of 8
    nblocks = -(-rows_arr // tile_r)
    ns = max(1, min(num_shards, nblocks))  # 2 TCs on v7x; sequential on v5e/v6e
    steps = -(-nblocks // ns)

    def in_map(c, i):
        # Clamp so a (rare) duplicated tail step never indexes off the array;
        # the kernel skips its contribution via pl.when(blk < nblocks).
        return (jnp.minimum(c * steps + i, nblocks - 1), 0)

    kernel = functools.partial(
        _bce_kernel, total=total, rows=rows, lane=lane, tile_r=tile_r,
        nblocks=nblocks, steps=steps, pos_weight=float(pos_weight))

    partials = pl.pallas_call(
        kernel,
        out_shape=jax.ShapeDtypeStruct((ns, 8, lane), jnp.float32),
        grid_spec=pltpu.PrefetchScalarGridSpec(
            num_scalar_prefetch=0,
            grid=(ns, steps),
            in_specs=[
                pl.BlockSpec((tile_r, lane), in_map),
                pl.BlockSpec((tile_r, lane), in_map),
            ],
            out_specs=pl.BlockSpec((None, 8, lane), lambda c, i: (c, 0, 0)),
        ),
        compiler_params=pltpu.CompilerParams(
            dimension_semantics=("parallel", "arbitrary"),
        ),
    )(x, y)

    # Tiny final reduction + mean in XLA (ns * 8 * lane elements).
    return jnp.sum(partials) / total


def _bce_ref(prediction, targets, pos_weight=1.0):
    # pure-JAX reference for verification
    x = prediction.astype(jnp.float32)
    y = targets.astype(jnp.float32)
    loss = pos_weight * y * jax.nn.softplus(-x) + (1.0 - y) * jax.nn.softplus(x)
    return jnp.mean(loss)


if __name__ == "__main__":
    key = jax.random.PRNGKey(0)
    k1, k2, k3, k4 = jax.random.split(key, 4)

    # Shapes consistent with the module's elementwise forward (NCHW logits).
    N, C, H, W = 2, 4, 16, 16
    prediction = jax.random.normal(k1, (N, C, H, W), dtype=jnp.float32) * 3.0
    targets = jax.random.bernoulli(k2, 0.5, (N, C, H, W)).astype(jnp.float32)

    # default module config: reduction='mean', pos_weight=1.0
    loss = jax.block_until_ready(bce_with_logits_loss(prediction, targets))
    ref = jax.block_until_ready(_bce_ref(prediction, targets))
    np.testing.assert_allclose(np.asarray(loss), np.asarray(ref),
                               rtol=1e-5, atol=1e-5)

    # non-default scalar pos_weight (supported by the module)
    loss_pw = jax.block_until_ready(
        bce_with_logits_loss(prediction, targets, pos_weight=2.0))
    ref_pw = jax.block_until_ready(_bce_ref(prediction, targets, pos_weight=2.0))
    np.testing.assert_allclose(np.asarray(loss_pw), np.asarray(ref_pw),
                               rtol=1e-5, atol=1e-5)

    # lane-unaligned shape exercising the masked boundary path
    p2 = jax.random.normal(k3, (2, 3, 7, 5), dtype=jnp.float32) * 3.0
    t2 = jax.random.bernoulli(k4, 0.5, (2, 3, 7, 5)).astype(jnp.float32)
    loss2 = jax.block_until_ready(bce_with_logits_loss(p2, t2))
    ref2 = jax.block_until_ready(_bce_ref(p2, t2))
    np.testing.assert_allclose(np.asarray(loss2), np.asarray(ref2),
                               rtol=1e-5, atol=1e-5)

    print("KERNEL_OK")
</pallas_src>

<mosaic_0001>
module attributes {stable_mosaic.version = 11 : i64} {
  func.func @_bce_kernel(%arg0: i32, %arg1: i32, %arg2: memref<8x512xf32, #tpu.memory_space<vmem>>, %arg3: memref<8x512xf32, #tpu.memory_space<vmem>>, %arg4: memref<1x8x512xf32, #tpu.memory_space<vmem>>) attributes {dimension_semantics = [#tpu.dimension_semantics<parallel>, #tpu.dimension_semantics<arbitrary>], iteration_bounds = array<i64: 1, 1>, scalar_prefetch = 0 : i64, scratch_operands = 0 : i64, tpu.core_type = #tpu.core_type<tc>, window_params = [{transform_indices = @transform_0, window_bounds = array<i64: 8, 512>}, {transform_indices = @transform_1, window_bounds = array<i64: 8, 512>}, {transform_indices = @transform_2, window_bounds = array<i64: 1, 8, 512>}]} {
    %c1_i32 = arith.constant 1 : i32
    %0 = arith.muli %arg0, %c1_i32 : i32
    %1 = arith.addi %0, %arg1 : i32
    %c0_i32 = arith.constant 0 : i32
    %2 = arith.cmpi eq, %arg1, %c0_i32 : i32
    %3 = arith.extui %2 : i1 to i32
    %c0_i32_0 = arith.constant 0 : i32
    %4 = arith.cmpi ne, %3, %c0_i32_0 : i32
    scf.if %4 {
      %cst = arith.constant 0.000000e+00 : f32
      %8 = vector.broadcast %cst : f32 to vector<8x512xf32>
      %c0 = arith.constant 0 : index
      %c0_3 = arith.constant 0 : index
      %c0_4 = arith.constant 0 : index
      %9 = vector.load %arg4[%c0, %c0_3, %c0_4] : memref<1x8x512xf32, #tpu.memory_space<vmem>>, vector<1x8x512xf32>
      %10 = vector.shape_cast %9 : vector<1x8x512xf32> to vector<8x512xf32>
      %11 = vector.shape_cast %8 : vector<8x512xf32> to vector<1x8x512xf32>
      tpu.vector_store %arg4[%c0, %c0_3, %c0_4], %11 {strides = array<i32>} : memref<1x8x512xf32, #tpu.memory_space<vmem>>, vector<1x8x512xf32>,
    } else {
    }
    %c1_i32_1 = arith.constant 1 : i32
    %5 = arith.cmpi slt, %1, %c1_i32_1 : i32
    %6 = arith.extui %5 : i1 to i32
    %c0_i32_2 = arith.constant 0 : i32
    %7 = arith.cmpi ne, %6, %c0_i32_2 : i32
    scf.if %7 {
      %c0 = arith.constant 0 : index
      %c0_3 = arith.constant 0 : index
      %8 = vector.load %arg2[%c0, %c0_3] : memref<8x512xf32, #tpu.memory_space<vmem>>, vector<8x512xf32>
      %c0_4 = arith.constant 0 : index
      %c0_5 = arith.constant 0 : index
      %9 = vector.load %arg3[%c0_4, %c0_5] : memref<8x512xf32, #tpu.memory_space<vmem>>, vector<8x512xf32>
      %cst = arith.constant 0.000000e+00 : f32
      %10 = vector.broadcast %cst : f32 to vector<8x512xf32>
      %11 = arith.maximumf %8, %10 : vector<8x512xf32>
      %12 = math.absf %8 : vector<8x512xf32>
      %cst_6 = arith.constant 0.000000e+00 : f32
      %13 = vector.broadcast %cst_6 : f32 to vector<8x512xf32>
      %14 = arith.subf %13, %12 : vector<8x512xf32>
      %15 = math.exp %14 : vector<8x512xf32>
      %16 = math.log1p %15 : vector<8x512xf32>
      %17 = arith.addf %11, %16 : vector<8x512xf32>
      %18 = arith.mulf %8, %9 : vector<8x512xf32>
      %19 = arith.subf %17, %18 : vector<8x512xf32>
      %c0_i32_7 = arith.constant 0 : i32
      %20 = arith.cmpi slt, %1, %c0_i32_7 : i32
      %21 = arith.extui %20 : i1 to i32
      %c0_i32_8 = arith.constant 0 : i32
      %22 = arith.cmpi ne, %21, %c0_i32_8 : i32
      scf.if %22 {
        %c0_11 = arith.constant 0 : index
        %c0_12 = arith.constant 0 : index
        %c0_13 = arith.constant 0 : index
        %26 = vector.load %arg4[%c0_11, %c0_12, %c0_13] : memref<1x8x512xf32, #tpu.memory_space<vmem>>, vector<1x8x512xf32>
        %27 = vector.shape_cast %26 : vector<1x8x512xf32> to vector<8x512xf32>
        %28 = vector.shape_cast %19 : vector<8x512xf32> to vector<1x8x512xf32>
        %cst_14 = arith.constant dense<0.000000e+00> : vector<8x512xf32>
        %29 = vector.multi_reduction <add>, %28, %cst_14 [0] : vector<1x8x512xf32> to vector<8x512xf32>
        %30 = arith.addf %27, %29 : vector<8x512xf32>
        %c0_15 = arith.constant 0 : index
        %c0_16 = arith.constant 0 : index
        %c0_17 = arith.constant 0 : index
        %31 = vector.load %arg4[%c0_15, %c0_16, %c0_17] : memref<1x8x512xf32, #tpu.memory_space<vmem>>, vector<1x8x512xf32>
        %32 = vector.shape_cast %31 : vector<1x8x512xf32> to vector<8x512xf32>
        %33 = vector.shape_cast %30 : vector<8x512xf32> to vector<1x8x512xf32>
        tpu.vector_store %arg4[%c0_15, %c0_16, %c0_17], %33 {strides = array<i32>} : memref<1x8x512xf32, #tpu.memory_space<vmem>>, vector<1x8x512xf32>,
      } else {
      }
      %c0_i32_9 = arith.constant 0 : i32
      %23 = arith.cmpi eq, %1, %c0_i32_9 : i32
      %24 = arith.extui %23 : i1 to i32
      %c0_i32_10 = arith.constant 0 : i32
      %25 = arith.cmpi ne, %24, %c0_i32_10 : i32
      scf.if %25 {
        %26 = tpu.iota {dimensions = array<i32: 0>} : vector<8x512xi32>
        %c8_i32 = arith.constant 8 : i32
        %27 = arith.muli %1, %c8_i32 : i32
        %28 = vector.broadcast %27 : i32 to vector<8x512xi32>
        %29 = arith.addi %26, %28 : vector<8x512xi32>
        %30 = tpu.iota {dimensions = array<i32: 1>} : vector<8x512xi32>
        %c3_i32 = arith.constant 3 : i32
        %31 = vector.broadcast %c3_i32 : i32 to vector<8x512xi32>
        %32 = arith.cmpi slt, %29, %31 : vector<8x512xi32>
        %c3_i32_11 = arith.constant 3 : i32
        %33 = vector.broadcast %c3_i32_11 : i32 to vector<8x512xi32>
        %34 = arith.cmpi eq, %29, %33 : vector<8x512xi32>
        %c512_i32 = arith.constant 512 : i32
        %35 = vector.broadcast %c512_i32 : i32 to vector<8x512xi32>
        %36 = arith.cmpi slt, %30, %35 : vector<8x512xi32>
        %37 = arith.andi %34, %36 : vector<8x512xi1>
        %38 = arith.ori %32, %37 : vector<8x512xi1>
        %cst_12 = arith.constant 0.000000e+00 : f32
        %39 = vector.broadcast %cst_12 : f32 to vector<8x512xf32>
        %40 = arith.select %38, %19, %39 : vector<8x512xi1>, vector<8x512xf32>
        %c0_13 = arith.constant 0 : index
        %c0_14 = arith.constant 0 : index
        %c0_15 = arith.constant 0 : index
        %41 = vector.load %arg4[%c0_13, %c0_14, %c0_15] : memref<1x8x512xf32, #tpu.memory_space<vmem>>, vector<1x8x512xf32>
        %42 = vector.shape_cast %41 : vector<1x8x512xf32> to vector<8x512xf32>
        %43 = vector.shape_cast %40 : vector<8x512xf32> to vector<1x8x512xf32>
        %cst_16 = arith.constant dense<0.000000e+00> : vector<8x512xf32>
        %44 = vector.multi_reduction <add>, %43, %cst_16 [0] : vector<1x8x512xf32> to vector<8x512xf32>
        %45 = arith.addf %42, %44 : vector<8x512xf32>
        %c0_17 = arith.constant 0 : index
        %c0_18 = arith.constant 0 : index
        %c0_19 = arith.constant 0 : index
        %46 = vector.load %arg4[%c0_17, %c0_18, %c0_19] : memref<1x8x512xf32, #tpu.memory_space<vmem>>, vector<1x8x512xf32>
        %47 = vector.shape_cast %46 : vector<1x8x512xf32> to vector<8x512xf32>
        %48 = vector.shape_cast %45 : vector<8x512xf32> to vector<1x8x512xf32>
        tpu.vector_store %arg4[%c0_17, %c0_18, %c0_19], %48 {strides = array<i32>} : memref<1x8x512xf32, #tpu.memory_space<vmem>>, vector<1x8x512xf32>,
      } else {
      }
    } else {
    }
    return
  }
  func.func @transform_0(%arg0: i32, %arg1: i32) -> (i32, i32) {
    %c1_i32 = arith.constant 1 : i32
    %0 = arith.muli %arg0, %c1_i32 : i32
    %1 = arith.addi %0, %arg1 : i32
    %c0_i32 = arith.constant 0 : i32
    %2 = arith.minsi %1, %c0_i32 : i32
    %c0_i32_0 = arith.constant 0 : i32
    %c0_i32_1 = arith.constant 0 : i32
    return %2, %c0_i32_0 : i32, i32
  }
  func.func @transform_1(%arg0: i32, %arg1: i32) -> (i32, i32) {
    %c1_i32 = arith.constant 1 : i32
    %0 = arith.muli %arg0, %c1_i32 : i32
    %1 = arith.addi %0, %arg1 : i32
    %c0_i32 = arith.constant 0 : i32
    %2 = arith.minsi %1, %c0_i32 : i32
    %c0_i32_0 = arith.constant 0 : i32
    %c0_i32_1 = arith.constant 0 : i32
    return %2, %c0_i32_0 : i32, i32
  }
  func.func @transform_2(%arg0: i32, %arg1: i32) -> (i32, i32, i32) {
    %c0_i32 = arith.constant 0 : i32
    %c0_i32_0 = arith.constant 0 : i32
    %c0_i32_1 = arith.constant 0 : i32
    return %arg0, %c0_i32, %c0_i32_0 : i32, i32, i32
  }
}

</mosaic_0001>

<llo_original>
// kernel: tpu_custom_call.1
$region0: #{tpu_custom_call.1}
  #allocation0 [shape = 'u32[]', space=smem, size = 0x4, offset = 0x4, fixed_abs, tag = 'smem constant byte address 0x4 - core index']
  #allocation1 [shape = 'u32[144,128]{1,0:T(1,128)}', space=vmem, size = 0x12000, scoped, tag = 'internal scratch']
  %s0 = inlined_call_operand.hbm [shape: f32[8,512], index: 0, kind: input, shape index: {}]
  %s1 = inlined_call_operand.hbm [shape: f32[8,512], index: 1, kind: input, shape index: {}]
  %s2 = inlined_call_operand.hbm [shape: f32[1,8,512], index: 2, kind: output, shape index: {}]
  %s3 = sld [smem:[#allocation0]]
  $region42: #{tpu_custom_call.1} parent=0
    _
  %s5 = ssub.s32 1, %s3
  %s6 = scalar_select 0, %s5, %s3
  $region1: #{tpu_custom_call.1} parent=0
    #allocation2 [shape = 'u8[16384]{0}', space=vmem, size = 0x4000, scoped, tag = 'input window, operand 0, single buffered']
    #allocation3 [shape = 's32[1]{0}', space=sflag, size = 0x4, scoped, tag = 'scoped memory for tpu_custom_call.1']
    #allocation4 [shape = 's32[1]{0}', space=sflag, size = 0x4, scoped, tag = 'scoped memory for tpu_custom_call.1']
    #allocation5 [shape = 'u8[16384]{0}', space=vmem, size = 0x4000, scoped, tag = 'input window, operand 1, single buffered']
    #allocation6 [shape = 's32[1]{0}', space=sflag, size = 0x4, scoped, tag = 'scoped memory for tpu_custom_call.1']
    #allocation7 [shape = 'u8[16384]{0}', space=vmem, size = 0x4000, scoped, tag = 'output window, operand 0, single buffered']
    %7 = vsyncpa [#allocation3], 0
    %8 = vsyncpa [#allocation6], 0
    %9 = vsyncpa [#allocation4], 0
    // Predicated region
    $region2: #{tpu_custom_call.1} parent=1 // pred_check
      _
    $region3: #{tpu_custom_call.1} parent=1 // pred_check_branch
      %11 = sbr.rel (0) target = $region5
    $region4: #{tpu_custom_call.1} parent=1 // pred_region
      %s12 = sadd.s32 0, 0
      %p13 = scmp.lt.s32.totalorder %s12, 0
      %s14 = scalar_select %p13, %s12, 0
      %s16 = ssub.s32 512, 512
      %17 = vsyncadd [#allocation3], %s16
      %s18 = smul.addr %s14, 4
      %s19 = smul.addr %s18, 128
      %s20 = scalar_lea.hbm %s0, %s19
      %s22 = sshll.u32 [#allocation2], 4
      %s23 = int_to_ptr.vmem [resolvable:$true] %s22
      %25 = dma.hbm_to_vmem [thread:$0]  %s20, 512, %s23, [#allocation3]
    $region5: #{tpu_custom_call.1} parent=1 // pred_fallthru
      _
    // Predicated region
    $region6: #{tpu_custom_call.1} parent=1 // pred_check
      _
    $region7: #{tpu_custom_call.1} parent=1 // pred_check_branch
      %27 = sbr.rel (0) target = $region9
    $region8: #{tpu_custom_call.1} parent=1 // pred_region
      %s28 = sadd.s32 0, 0
      %p29 = scmp.lt.s32.totalorder %s28, 0
      %s30 = scalar_select %p29, %s28, 0
      %s32 = ssub.s32 512, 512
      %33 = vsyncadd [#allocation6], %s32
      %s34 = smul.addr %s30, 4
      %s35 = smul.addr %s34, 128
      %s36 = scalar_lea.hbm %s1, %s35
      %s38 = sshll.u32 [#allocation5], 4
      %s39 = int_to_ptr.vmem [resolvable:$true] %s38
      %41 = dma.hbm_to_vmem [thread:$0]  %s36, 512, %s39, [#allocation6]
    $region9: #{tpu_custom_call.1} parent=1 // pred_fallthru
      _
    // Predicated region
    $region10: #{tpu_custom_call.1} parent=1 // pred_check
      _
    $region11: #{tpu_custom_call.1} parent=1 // pred_check_branch
      %43 = sbr.rel (0) target = $region13
    $region12: #{tpu_custom_call.1} parent=1 // pred_region
      %44 = dma.done [#allocation3], 512
    $region13: #{tpu_custom_call.1} parent=1 // pred_fallthru
      _
    // Predicated region
    $region14: #{tpu_custom_call.1} parent=1 // pred_check
      _
    $region15: #{tpu_custom_call.1} parent=1 // pred_check_branch
      %46 = sbr.rel (0) target = $region17
    $region16: #{tpu_custom_call.1} parent=1 // pred_region
      %47 = dma.done [#allocation6], 512
    $region17: #{tpu_custom_call.1} parent=1 // pred_fallthru
      _
    %s48 = sadd.s32 0, 0
    %p49 = scmp.lt.s32.totalorder %s48, 0
    %s50 = scalar_select %p49, %s48, 0
    %s51 = sadd.s32 0, 0
    %p52 = scmp.lt.s32.totalorder %s51, 0
    %s53 = scalar_select %p52, %s51, 0
    %s54 = sadd.s32 0, 0
    %p55 = scmp.eq.s32.totalorder 0, 0
    // Predicated region
    $region18: #{tpu_custom_call.1} parent=1 // pred_check
      %p56 = pneg %p55
    $region19: #{tpu_custom_call.1} parent=1 // pred_check_branch
      %58 = sbr.rel (%p56) target = $region21
    $region20: #{tpu_custom_call.1} parent=1 // pred_region
      %59 = vst [vmem:[#allocation7] sm:$0xff] 0.0
      %60 = vst [vmem:[#allocation7 + $0x8] sm:$0xff] 0.0
      %61 = vst [vmem:[#allocation7 + $0x10] sm:$0xff] 0.0
      %62 = vst [vmem:[#allocation7 + $0x18] sm:$0xff] 0.0
    $region21: #{tpu_custom_call.1} parent=1 // pred_fallthru
      _
    %p63 = scmp.lt.s32.totalorder %s54, 1
    // Predicated region
    $region22: #{tpu_custom_call.1} parent=1 // pred_check
      %p64 = pneg %p63
    $region23: #{tpu_custom_call.1} parent=1 // pred_check_branch
      %66 = sbr.rel (%p64) target = $region25
    $region24: #{tpu_custom_call.1} parent=1 // pred_region
      %v67 = vld [vmem:[#allocation2] sm:$0xff]
      %v68 = vld [vmem:[#allocation2 + $0x8] sm:$0xff]
      %v69 = vld [vmem:[#allocation2 + $0x10] sm:$0xff]
      %v70 = vld [vmem:[#allocation2 + $0x18] sm:$0xff]
      %v71 = vld [vmem:[#allocation5] sm:$0xff]
      %v72 = vld [vmem:[#allocation5 + $0x8] sm:$0xff]
      %v73 = vld [vmem:[#allocation5 + $0x10] sm:$0xff]
      %v74 = vld [vmem:[#allocation5 + $0x18] sm:$0xff]
      %v75 = vmax.f32 %v67, 0.0
      %v76 = vmax.f32 %v68, 0.0
      %v77 = vmax.f32 %v69, 0.0
      %v78 = vmax.f32 %v70, 0.0
      %v79 = vand.u32 2147483647, %v67
      %v80 = vand.u32 2147483647, %v68
      %v81 = vand.u32 2147483647, %v69
      %v82 = vand.u32 2147483647, %v70
      %v83 = vsub.f32 0.0, %v79
      %v84 = vsub.f32 0.0, %v80
      %v85 = vsub.f32 0.0, %v81
      %v86 = vsub.f32 0.0, %v82
      %v87 = vmul.f32 %v83, 1.442695
      %v88 = vpow.pop %v87
      %v89 = vmul.f32 %v84, 1.442695
      %v90 = vpow.pop %v89
      %v91 = vmul.f32 %v85, 1.442695
      %v92 = vpow.pop %v91
      %v93 = vmul.f32 %v86, 1.442695
      %v94 = vpow.pop %v93
      %v95 = vadd.f32 %v88, 1.0
      %v96 = vlog2.pop %v95
      %v97 = vmul.f32 %v96, 0.6931472
      %v98 = vmul.f32 -0.5, %v88
      %v99 = vadd.f32 %v98, 1.0
      %v100 = vmul.f32 %v99, %v88
      %v101 = vand.u32 2147483647, %v88
      %vm102 = vcmp.lt.f32.partialorder %v101, 0.0004427343
      %v103 = vsel %vm102, %v100, %v97
      %v104 = vadd.f32 %v90, 1.0
      %v105 = vlog2.pop %v104
      %v106 = vmul.f32 %v105, 0.6931472
      %v107 = vmul.f32 -0.5, %v90
      %v108 = vadd.f32 %v107, 1.0
      %v109 = vmul.f32 %v108, %v90
      %v110 = vand.u32 2147483647, %v90
      %vm111 = vcmp.lt.f32.partialorder %v110, 0.0004427343
      %v112 = vsel %vm111, %v109, %v106
      %v113 = vadd.f32 %v92, 1.0
      %v114 = vlog2.pop %v113
      %v115 = vmul.f32 %v114, 0.6931472
      %v116 = vmul.f32 -0.5, %v92
      %v117 = vadd.f32 %v116, 1.0
      %v118 = vmul.f32 %v117, %v92
      %v119 = vand.u32 2147483647, %v92
      %vm120 = vcmp.lt.f32.partialorder %v119, 0.0004427343
      %v121 = vsel %vm120, %v118, %v115
      %v122 = vadd.f32 %v94, 1.0
      %v123 = vlog2.pop %v122
      %v124 = vmul.f32 %v123, 0.6931472
      %v125 = vmul.f32 -0.5, %v94
      %v126 = vadd.f32 %v125, 1.0
      %v127 = vmul.f32 %v126, %v94
      %v128 = vand.u32 2147483647, %v94
      %vm129 = vcmp.lt.f32.partialorder %v128, 0.0004427343
      %v130 = vsel %vm129, %v127, %v124
      %v131 = vadd.f32 %v75, %v103
      %v132 = vadd.f32 %v76, %v112
      %v133 = vadd.f32 %v77, %v121
      %v134 = vadd.f32 %v78, %v130
      %v135 = vmul.f32 %v67, %v71
      %v136 = vmul.f32 %v68, %v72
      %v137 = vmul.f32 %v69, %v73
      %v138 = vmul.f32 %v70, %v74
      %v139 = vsub.f32 %v131, %v135
      %v140 = vsub.f32 %v132, %v136
      %v141 = vsub.f32 %v133, %v137
      %v142 = vsub.f32 %v134, %v138
      %p143 = scmp.lt.s32.totalorder %s54, 0
      // Predicated region
      $region26: #{tpu_custom_call.1} parent=24 // pred_check
        %p144 = pneg %p143
      $region27: #{tpu_custom_call.1} parent=24 // pred_check_branch
        %146 = sbr.rel (%p144) target = $region29
      $region28: #{tpu_custom_call.1} parent=24 // pred_region
        %v147 = vld [vmem:[#allocation7] sm:$0xff]
        %v148 = vld [vmem:[#allocation7 + $0x8] sm:$0xff]
        %v149 = vld [vmem:[#allocation7 + $0x10] sm:$0xff]
        %v150 = vld [vmem:[#allocation7 + $0x18] sm:$0xff]
        %v151 = vadd.f32 %v139, 0.0
        %v152 = vadd.f32 %v140, 0.0
        %v153 = vadd.f32 %v141, 0.0
        %v154 = vadd.f32 %v142, 0.0
        %v155 = vadd.f32 %v147, %v151
        %v156 = vadd.f32 %v148, %v152
        %v157 = vadd.f32 %v149, %v153
        %v158 = vadd.f32 %v150, %v154
        %159 = vst [vmem:[#allocation7] sm:$0xff] %v155
        %160 = vst [vmem:[#allocation7 + $0x8] sm:$0xff] %v156
        %161 = vst [vmem:[#allocation7 + $0x10] sm:$0xff] %v157
        %162 = vst [vmem:[#allocation7 + $0x18] sm:$0xff] %v158
      $region29: #{tpu_custom_call.1} parent=24 // pred_fallthru
        _
      %p163 = scmp.eq.s32.totalorder %s54, 0
      // Predicated region
      $region30: #{tpu_custom_call.1} parent=24 // pred_check
        %p164 = pneg %p163
      $region31: #{tpu_custom_call.1} parent=24 // pred_check_branch
        %166 = sbr.rel (%p164) target = $region33
      $region32: #{tpu_custom_call.1} parent=24 // pred_region
        %v167 = vlaneseq
        %v168 = vshrl.u32 %v167, 7
        %s169 = smul.u32 %s54, 8
        %v170 = vstv %s169
        %v171 = vadd.s32 %v168, %v170
        %v172 = vlaneseq
        %v173 = vand.u32 %v172, 127
        %v174 = vadd.s32 %v173, 128
        %v175 = vadd.s32 %v173, 256
        %v176 = vadd.s32 %v173, 384
        %vm177 = vcmp.lt.s32.totalorder %v171, 3
        %vm178 = vcmp.eq.s32.totalorder %v171, 3
        %vm179 = vcmp.lt.s32.totalorder %v173, 512
        %vm180 = vcmp.lt.s32.totalorder %v174, 512
        %vm181 = vcmp.lt.s32.totalorder %v175, 512
        %vm182 = vcmp.lt.s32.totalorder %v176, 512
        %vm183 = vmand %vm178, %vm179
        %vm184 = vmand %vm178, %vm180
        %vm185 = vmand %vm178, %vm181
        %vm186 = vmand %vm178, %vm182
        %vm187 = vmor %vm177, %vm183
        %vm188 = vmor %vm177, %vm184
        %vm189 = vmor %vm177, %vm185
        %vm190 = vmor %vm177, %vm186
        %v191 = vsel %vm187, %v139, 0.0
        %v192 = vsel %vm188, %v140, 0.0
        %v193 = vsel %vm189, %v141, 0.0
        %v194 = vsel %vm190, %v142, 0.0
        %v195 = vld [vmem:[#allocation7] sm:$0xff]
        %v196 = vld [vmem:[#allocation7 + $0x8] sm:$0xff]
        %v197 = vld [vmem:[#allocation7 + $0x10] sm:$0xff]
        %v198 = vld [vmem:[#allocation7 + $0x18] sm:$0xff]
        %v199 = vadd.f32 %v191, 0.0
        %v200 = vadd.f32 %v192, 0.0
        %v201 = vadd.f32 %v193, 0.0
        %v202 = vadd.f32 %v194, 0.0
        %v203 = vadd.f32 %v195, %v199
        %v204 = vadd.f32 %v196, %v200
        %v205 = vadd.f32 %v197, %v201
        %v206 = vadd.f32 %v198, %v202
        %207 = vst [vmem:[#allocation7] sm:$0xff] %v203
        %208 = vst [vmem:[#allocation7 + $0x8] sm:$0xff] %v204
        %209 = vst [vmem:[#allocation7 + $0x10] sm:$0xff] %v205
        %210 = vst [vmem:[#allocation7 + $0x18] sm:$0xff] %v206
      $region33: #{tpu_custom_call.1} parent=24 // pred_fallthru
        _
    $region25: #{tpu_custom_call.1} parent=1 // pred_fallthru
      _
    // Predicated region
    $region34: #{tpu_custom_call.1} parent=1 // pred_check
      _
    $region35: #{tpu_custom_call.1} parent=1 // pred_check_branch
      %212 = sbr.rel (0) target = $region37
    $region36: #{tpu_custom_call.1} parent=1 // pred_region
      %s214 = ssub.s32 512, 512
      %215 = vsyncadd [#allocation4], %s214
      %s217 = sshll.u32 [#allocation7], 4
      %s218 = int_to_ptr.vmem [resolvable:$true] %s217
      %220 = dma.vmem_to_hbm [thread:$0]  %s218, 512, %s2, [#allocation4]
    $region37: #{tpu_custom_call.1} parent=1 // pred_fallthru
      _
    // Predicated region
    $region38: #{tpu_custom_call.1} parent=1 // pred_check
      _
    $region39: #{tpu_custom_call.1} parent=1 // pred_check_branch
      %222 = sbr.rel (0) target = $region41
    $region40: #{tpu_custom_call.1} parent=1 // pred_region
      %223 = dma.done [#allocation4], 512
    $region41: #{tpu_custom_call.1} parent=1 // pred_fallthru
      _
    %224 = vsyncpa [#allocation3], 1
    %225 = vsyncpa [#allocation6], 1
    %226 = vsyncpa [#allocation4], 1

</llo_original>
